<compile_context>
chip_gen: v7x
topology: tpu7x:2x2x1
jax: 0.10.0
libtpu: 0.0.40
codegen_flags: <defaults>
</compile_context>

<pallas_src>
import functools

import jax
import jax.numpy as jnp
from jax.experimental import pallas as pl
from jax.experimental.pallas import tpu as pltpu


_LANES = 128  # batch rows packed per vreg row


def _round_up(x, m):
    return (x + m - 1) // m * m


def _softmax_sample_kernel(x_ref, u_ref, out_ref, *, temp, num_actions):
    """One batch tile: inverse-CDF categorical sample of softmax(x * temp).

    x_ref:   (TB, A_pad, 128) float  -- logit of action a for batch row l at [., a, l]
    u_ref:   (TB, 128)        f32    -- one uniform in [0, 1) per batch row
    out_ref: (TB, 128)        int32  -- sampled action index per batch row
    """
    # Pass 1: per-row max of the scaled logits (numerical stability).  Padded
    # action sublanes (a >= num_actions) are simply never read.
    m = x_ref[:, 0, :].astype(jnp.float32) * temp
    for a in range(1, num_actions):
        m = jnp.maximum(m, x_ref[:, a, :].astype(jnp.float32) * temp)

    # Pass 2: unnormalized probabilities e_a and their sum (softmax denominator).
    es = []
    for a in range(num_actions):
        es.append(jnp.exp(x_ref[:, a, :].astype(jnp.float32) * temp - m))
    denom = es[0]
    for ea in es[1:]:
        denom = denom + ea

    # Inverse-CDF sampling without normalizing: action = #{a : cdf_a <= u * denom}.
    # `run` accumulates in the same order as `denom`, so run_final == denom
    # bit-exactly and u < 1 keeps the count < num_actions; the clamp only guards
    # the half-ulp rounding corner of u*denom.
    thresh = u_ref[...] * denom
    run = jnp.zeros_like(denom)
    cnt = jnp.zeros(denom.shape, dtype=jnp.int32)
    for ea in es:
        run = run + ea
        cnt = cnt + (run <= thresh).astype(jnp.int32)

    out_ref[...] = jnp.minimum(cnt, num_actions - 1)


def softmax_body(outputs, temp, key, *, rows_per_block=32768):
    """Pallas equivalent of SoftmaxBody(temp)(outputs).

    outputs: (B, A) float logits / Q-values.
    temp:    python float temperature.
    key:     jax.random key; exactly one uniform per row is consumed.
    Returns: (B, 1) int32 sampled action indices.
    # TODO(synk): PyTorch returns int64 actions; int32 here (TPU-native int width).
    """
    batch, num_actions = outputs.shape
    if num_actions < 1:
        raise ValueError("need at least one action")
    # TODO(synk): for very large A (hundreds+) the unrolled per-action chain should
    # become an in-kernel fori_loop over action sublanes; Doom-style heads are tiny.

    a_pad = _round_up(num_actions, 8)            # action dim -> sublanes

    # Packed-row tile: a multiple of 8 packed rows (sublane granularity), or all
    # of them.  Default 256 packed rows = 32768 batch rows = ~1 MiB of logits per
    # grid step, ~5 MiB of VMEM incl. double buffering -> safe on v5e/v6e/v7x.
    bp = pl.cdiv(batch, _LANES)                  # packed rows actually needed
    bp8 = _round_up(bp, 8)
    tb = min(bp8, max(8, _round_up(max(rows_per_block, _LANES) // _LANES, 8)))
    bp_pad = _round_up(bp8, tb)
    b_pad = bp_pad * _LANES

    # Lane-dense packing: actions -> sublanes, batch rows -> lanes.  Padded batch
    # rows compute on zeros (harmless) and are sliced away on return.
    x = jnp.zeros((b_pad, a_pad), outputs.dtype).at[:batch, :num_actions].set(outputs)
    x = x.reshape(bp_pad, _LANES, a_pad).transpose(0, 2, 1)        # (Bp, A_pad, 128)

    # One uniform per batch row, packed lane-dense (128 rows per vreg row).
    u = jax.random.uniform(key, (b_pad,), dtype=jnp.float32).reshape(bp_pad, _LANES)

    kernel = functools.partial(
        _softmax_sample_kernel, temp=float(temp), num_actions=num_actions)

    out = pl.pallas_call(
        kernel,
        out_shape=jax.ShapeDtypeStruct((bp_pad, _LANES), jnp.int32),
        grid=(bp_pad // tb,),
        in_specs=[
            pl.BlockSpec((tb, a_pad, _LANES), lambda i: (i, 0, 0)),  # logits tile
            pl.BlockSpec((tb, _LANES), lambda i: (i, 0)),            # uniforms tile
        ],
        out_specs=pl.BlockSpec((tb, _LANES), lambda i: (i, 0)),      # actions tile
        compiler_params=pltpu.CompilerParams(
            # Batch tiles are fully independent.  On v7x, switch this axis to
            # pltpu.CORE_PARALLEL if a profile shows one TensorCore idle.
            dimension_semantics=("parallel",),
        ),
    )(x, u)

    return out.reshape(b_pad, 1)[:batch]


if __name__ == "__main__":
    key = jax.random.PRNGKey(0)
    k_x, k_u = jax.random.split(key)

    batch, num_actions = 2, 8
    temp = 7.0

    # Deterministic example inputs (analogous to the CNN head outputs in Doomgameai).
    outputs = jax.random.normal(k_x, (batch, num_actions), dtype=jnp.float32)

    actions = softmax_body(outputs, temp, k_u)
    actions = jax.block_until_ready(actions)

    assert actions.shape == (batch, 1)
    assert actions.dtype == jnp.int32
    assert bool(jnp.all((actions >= 0) & (actions < num_actions)))
    print("KERNEL_OK")
</pallas_src>

<mosaic_0001>
module attributes {stable_mosaic.version = 11 : i64} {
  func.func @_softmax_sample_kernel(%arg0: i32, %arg1: memref<8x8x128xf32, #tpu.memory_space<vmem>>, %arg2: memref<8x128xf32, #tpu.memory_space<vmem>>, %arg3: memref<8x128xi32, #tpu.memory_space<vmem>>) attributes {dimension_semantics = [#tpu.dimension_semantics<parallel>], iteration_bounds = array<i64: 1>, scalar_prefetch = 0 : i64, scratch_operands = 0 : i64, tpu.core_type = #tpu.core_type<tc>, window_params = [{transform_indices = @transform_0, window_bounds = array<i64: 8, 8, 128>}, {transform_indices = @transform_1, window_bounds = array<i64: 8, 128>}, {transform_indices = @transform_2, window_bounds = array<i64: 8, 128>}]} {
    %c0 = arith.constant 0 : index
    %c0_0 = arith.constant 0 : index
    %c0_1 = arith.constant 0 : index
    %0 = vector.load %arg1[%c0, %c0_0, %c0_1] : memref<8x8x128xf32, #tpu.memory_space<vmem>>, vector<8x1x128xf32>
    %1 = vector.shape_cast %0 : vector<8x1x128xf32> to vector<8x128xf32>
    %cst = arith.constant 7.000000e+00 : f32
    %2 = vector.broadcast %cst : f32 to vector<8x128xf32>
    %3 = arith.mulf %1, %2 : vector<8x128xf32>
    %c0_2 = arith.constant 0 : index
    %c1 = arith.constant 1 : index
    %c0_3 = arith.constant 0 : index
    %4 = vector.load %arg1[%c0_2, %c1, %c0_3] : memref<8x8x128xf32, #tpu.memory_space<vmem>>, vector<8x1x128xf32>
    %5 = vector.shape_cast %4 : vector<8x1x128xf32> to vector<8x128xf32>
    %cst_4 = arith.constant 7.000000e+00 : f32
    %6 = vector.broadcast %cst_4 : f32 to vector<8x128xf32>
    %7 = arith.mulf %5, %6 : vector<8x128xf32>
    %8 = arith.maximumf %3, %7 : vector<8x128xf32>
    %c0_5 = arith.constant 0 : index
    %c2 = arith.constant 2 : index
    %c0_6 = arith.constant 0 : index
    %9 = vector.load %arg1[%c0_5, %c2, %c0_6] : memref<8x8x128xf32, #tpu.memory_space<vmem>>, vector<8x1x128xf32>
    %10 = vector.shape_cast %9 : vector<8x1x128xf32> to vector<8x128xf32>
    %cst_7 = arith.constant 7.000000e+00 : f32
    %11 = vector.broadcast %cst_7 : f32 to vector<8x128xf32>
    %12 = arith.mulf %10, %11 : vector<8x128xf32>
    %13 = arith.maximumf %8, %12 : vector<8x128xf32>
    %c0_8 = arith.constant 0 : index
    %c3 = arith.constant 3 : index
    %c0_9 = arith.constant 0 : index
    %14 = vector.load %arg1[%c0_8, %c3, %c0_9] : memref<8x8x128xf32, #tpu.memory_space<vmem>>, vector<8x1x128xf32>
    %15 = vector.shape_cast %14 : vector<8x1x128xf32> to vector<8x128xf32>
    %cst_10 = arith.constant 7.000000e+00 : f32
    %16 = vector.broadcast %cst_10 : f32 to vector<8x128xf32>
    %17 = arith.mulf %15, %16 : vector<8x128xf32>
    %18 = arith.maximumf %13, %17 : vector<8x128xf32>
    %c0_11 = arith.constant 0 : index
    %c4 = arith.constant 4 : index
    %c0_12 = arith.constant 0 : index
    %19 = vector.load %arg1[%c0_11, %c4, %c0_12] : memref<8x8x128xf32, #tpu.memory_space<vmem>>, vector<8x1x128xf32>
    %20 = vector.shape_cast %19 : vector<8x1x128xf32> to vector<8x128xf32>
    %cst_13 = arith.constant 7.000000e+00 : f32
    %21 = vector.broadcast %cst_13 : f32 to vector<8x128xf32>
    %22 = arith.mulf %20, %21 : vector<8x128xf32>
    %23 = arith.maximumf %18, %22 : vector<8x128xf32>
    %c0_14 = arith.constant 0 : index
    %c5 = arith.constant 5 : index
    %c0_15 = arith.constant 0 : index
    %24 = vector.load %arg1[%c0_14, %c5, %c0_15] : memref<8x8x128xf32, #tpu.memory_space<vmem>>, vector<8x1x128xf32>
    %25 = vector.shape_cast %24 : vector<8x1x128xf32> to vector<8x128xf32>
    %cst_16 = arith.constant 7.000000e+00 : f32
    %26 = vector.broadcast %cst_16 : f32 to vector<8x128xf32>
    %27 = arith.mulf %25, %26 : vector<8x128xf32>
    %28 = arith.maximumf %23, %27 : vector<8x128xf32>
    %c0_17 = arith.constant 0 : index
    %c6 = arith.constant 6 : index
    %c0_18 = arith.constant 0 : index
    %29 = vector.load %arg1[%c0_17, %c6, %c0_18] : memref<8x8x128xf32, #tpu.memory_space<vmem>>, vector<8x1x128xf32>
    %30 = vector.shape_cast %29 : vector<8x1x128xf32> to vector<8x128xf32>
    %cst_19 = arith.constant 7.000000e+00 : f32
    %31 = vector.broadcast %cst_19 : f32 to vector<8x128xf32>
    %32 = arith.mulf %30, %31 : vector<8x128xf32>
    %33 = arith.maximumf %28, %32 : vector<8x128xf32>
    %c0_20 = arith.constant 0 : index
    %c7 = arith.constant 7 : index
    %c0_21 = arith.constant 0 : index
    %34 = vector.load %arg1[%c0_20, %c7, %c0_21] : memref<8x8x128xf32, #tpu.memory_space<vmem>>, vector<8x1x128xf32>
    %35 = vector.shape_cast %34 : vector<8x1x128xf32> to vector<8x128xf32>
    %cst_22 = arith.constant 7.000000e+00 : f32
    %36 = vector.broadcast %cst_22 : f32 to vector<8x128xf32>
    %37 = arith.mulf %35, %36 : vector<8x128xf32>
    %38 = arith.maximumf %33, %37 : vector<8x128xf32>
    %c0_23 = arith.constant 0 : index
    %c0_24 = arith.constant 0 : index
    %c0_25 = arith.constant 0 : index
    %39 = vector.load %arg1[%c0_23, %c0_24, %c0_25] : memref<8x8x128xf32, #tpu.memory_space<vmem>>, vector<8x1x128xf32>
    %40 = vector.shape_cast %39 : vector<8x1x128xf32> to vector<8x128xf32>
    %cst_26 = arith.constant 7.000000e+00 : f32
    %41 = vector.broadcast %cst_26 : f32 to vector<8x128xf32>
    %42 = arith.mulf %40, %41 : vector<8x128xf32>
    %43 = arith.subf %42, %38 : vector<8x128xf32>
    %44 = math.exp %43 : vector<8x128xf32>
    %c0_27 = arith.constant 0 : index
    %c1_28 = arith.constant 1 : index
    %c0_29 = arith.constant 0 : index
    %45 = vector.load %arg1[%c0_27, %c1_28, %c0_29] : memref<8x8x128xf32, #tpu.memory_space<vmem>>, vector<8x1x128xf32>
    %46 = vector.shape_cast %45 : vector<8x1x128xf32> to vector<8x128xf32>
    %cst_30 = arith.constant 7.000000e+00 : f32
    %47 = vector.broadcast %cst_30 : f32 to vector<8x128xf32>
    %48 = arith.mulf %46, %47 : vector<8x128xf32>
    %49 = arith.subf %48, %38 : vector<8x128xf32>
    %50 = math.exp %49 : vector<8x128xf32>
    %c0_31 = arith.constant 0 : index
    %c2_32 = arith.constant 2 : index
    %c0_33 = arith.constant 0 : index
    %51 = vector.load %arg1[%c0_31, %c2_32, %c0_33] : memref<8x8x128xf32, #tpu.memory_space<vmem>>, vector<8x1x128xf32>
    %52 = vector.shape_cast %51 : vector<8x1x128xf32> to vector<8x128xf32>
    %cst_34 = arith.constant 7.000000e+00 : f32
    %53 = vector.broadcast %cst_34 : f32 to vector<8x128xf32>
    %54 = arith.mulf %52, %53 : vector<8x128xf32>
    %55 = arith.subf %54, %38 : vector<8x128xf32>
    %56 = math.exp %55 : vector<8x128xf32>
    %c0_35 = arith.constant 0 : index
    %c3_36 = arith.constant 3 : index
    %c0_37 = arith.constant 0 : index
    %57 = vector.load %arg1[%c0_35, %c3_36, %c0_37] : memref<8x8x128xf32, #tpu.memory_space<vmem>>, vector<8x1x128xf32>
    %58 = vector.shape_cast %57 : vector<8x1x128xf32> to vector<8x128xf32>
    %cst_38 = arith.constant 7.000000e+00 : f32
    %59 = vector.broadcast %cst_38 : f32 to vector<8x128xf32>
    %60 = arith.mulf %58, %59 : vector<8x128xf32>
    %61 = arith.subf %60, %38 : vector<8x128xf32>
    %62 = math.exp %61 : vector<8x128xf32>
    %c0_39 = arith.constant 0 : index
    %c4_40 = arith.constant 4 : index
    %c0_41 = arith.constant 0 : index
    %63 = vector.load %arg1[%c0_39, %c4_40, %c0_41] : memref<8x8x128xf32, #tpu.memory_space<vmem>>, vector<8x1x128xf32>
    %64 = vector.shape_cast %63 : vector<8x1x128xf32> to vector<8x128xf32>
    %cst_42 = arith.constant 7.000000e+00 : f32
    %65 = vector.broadcast %cst_42 : f32 to vector<8x128xf32>
    %66 = arith.mulf %64, %65 : vector<8x128xf32>
    %67 = arith.subf %66, %38 : vector<8x128xf32>
    %68 = math.exp %67 : vector<8x128xf32>
    %c0_43 = arith.constant 0 : index
    %c5_44 = arith.constant 5 : index
    %c0_45 = arith.constant 0 : index
    %69 = vector.load %arg1[%c0_43, %c5_44, %c0_45] : memref<8x8x128xf32, #tpu.memory_space<vmem>>, vector<8x1x128xf32>
    %70 = vector.shape_cast %69 : vector<8x1x128xf32> to vector<8x128xf32>
    %cst_46 = arith.constant 7.000000e+00 : f32
    %71 = vector.broadcast %cst_46 : f32 to vector<8x128xf32>
    %72 = arith.mulf %70, %71 : vector<8x128xf32>
    %73 = arith.subf %72, %38 : vector<8x128xf32>
    %74 = math.exp %73 : vector<8x128xf32>
    %c0_47 = arith.constant 0 : index
    %c6_48 = arith.constant 6 : index
    %c0_49 = arith.constant 0 : index
    %75 = vector.load %arg1[%c0_47, %c6_48, %c0_49] : memref<8x8x128xf32, #tpu.memory_space<vmem>>, vector<8x1x128xf32>
    %76 = vector.shape_cast %75 : vector<8x1x128xf32> to vector<8x128xf32>
    %cst_50 = arith.constant 7.000000e+00 : f32
    %77 = vector.broadcast %cst_50 : f32 to vector<8x128xf32>
    %78 = arith.mulf %76, %77 : vector<8x128xf32>
    %79 = arith.subf %78, %38 : vector<8x128xf32>
    %80 = math.exp %79 : vector<8x128xf32>
    %c0_51 = arith.constant 0 : index
    %c7_52 = arith.constant 7 : index
    %c0_53 = arith.constant 0 : index
    %81 = vector.load %arg1[%c0_51, %c7_52, %c0_53] : memref<8x8x128xf32, #tpu.memory_space<vmem>>, vector<8x1x128xf32>
    %82 = vector.shape_cast %81 : vector<8x1x128xf32> to vector<8x128xf32>
    %cst_54 = arith.constant 7.000000e+00 : f32
    %83 = vector.broadcast %cst_54 : f32 to vector<8x128xf32>
    %84 = arith.mulf %82, %83 : vector<8x128xf32>
    %85 = arith.subf %84, %38 : vector<8x128xf32>
    %86 = math.exp %85 : vector<8x128xf32>
    %87 = arith.addf %44, %50 : vector<8x128xf32>
    %88 = arith.addf %87, %56 : vector<8x128xf32>
    %89 = arith.addf %88, %62 : vector<8x128xf32>
    %90 = arith.addf %89, %68 : vector<8x128xf32>
    %91 = arith.addf %90, %74 : vector<8x128xf32>
    %92 = arith.addf %91, %80 : vector<8x128xf32>
    %93 = arith.addf %92, %86 : vector<8x128xf32>
    %c0_55 = arith.constant 0 : index
    %c0_56 = arith.constant 0 : index
    %94 = vector.load %arg2[%c0_55, %c0_56] : memref<8x128xf32, #tpu.memory_space<vmem>>, vector<8x128xf32>
    %95 = arith.mulf %94, %93 : vector<8x128xf32>
    %cst_57 = arith.constant 0.000000e+00 : f32
    %96 = vector.broadcast %cst_57 : f32 to vector<8x128xf32>
    %c0_i32 = arith.constant 0 : i32
    %97 = vector.broadcast %c0_i32 : i32 to vector<8x128xi32>
    %98 = arith.addf %96, %44 : vector<8x128xf32>
    %99 = arith.cmpf ole, %98, %95 : vector<8x128xf32>
    %100 = arith.extui %99 : vector<8x128xi1> to vector<8x128xi32>
    %101 = arith.addi %97, %100 : vector<8x128xi32>
    %102 = arith.addf %98, %50 : vector<8x128xf32>
    %103 = arith.cmpf ole, %102, %95 : vector<8x128xf32>
    %104 = arith.extui %103 : vector<8x128xi1> to vector<8x128xi32>
    %105 = arith.addi %101, %104 : vector<8x128xi32>
    %106 = arith.addf %102, %56 : vector<8x128xf32>
    %107 = arith.cmpf ole, %106, %95 : vector<8x128xf32>
    %108 = arith.extui %107 : vector<8x128xi1> to vector<8x128xi32>
    %109 = arith.addi %105, %108 : vector<8x128xi32>
    %110 = arith.addf %106, %62 : vector<8x128xf32>
    %111 = arith.cmpf ole, %110, %95 : vector<8x128xf32>
    %112 = arith.extui %111 : vector<8x128xi1> to vector<8x128xi32>
    %113 = arith.addi %109, %112 : vector<8x128xi32>
    %114 = arith.addf %110, %68 : vector<8x128xf32>
    %115 = arith.cmpf ole, %114, %95 : vector<8x128xf32>
    %116 = arith.extui %115 : vector<8x128xi1> to vector<8x128xi32>
    %117 = arith.addi %113, %116 : vector<8x128xi32>
    %118 = arith.addf %114, %74 : vector<8x128xf32>
    %119 = arith.cmpf ole, %118, %95 : vector<8x128xf32>
    %120 = arith.extui %119 : vector<8x128xi1> to vector<8x128xi32>
    %121 = arith.addi %117, %120 : vector<8x128xi32>
    %122 = arith.addf %118, %80 : vector<8x128xf32>
    %123 = arith.cmpf ole, %122, %95 : vector<8x128xf32>
    %124 = arith.extui %123 : vector<8x128xi1> to vector<8x128xi32>
    %125 = arith.addi %121, %124 : vector<8x128xi32>
    %126 = arith.addf %122, %86 : vector<8x128xf32>
    %127 = arith.cmpf ole, %126, %95 : vector<8x128xf32>
    %128 = arith.extui %127 : vector<8x128xi1> to vector<8x128xi32>
    %129 = arith.addi %125, %128 : vector<8x128xi32>
    %c7_i32 = arith.constant 7 : i32
    %130 = vector.broadcast %c7_i32 : i32 to vector<8x128xi32>
    %131 = arith.minsi %129, %130 : vector<8x128xi32>
    %c0_58 = arith.constant 0 : index
    %c0_59 = arith.constant 0 : index
    %132 = vector.load %arg3[%c0_58, %c0_59] : memref<8x128xi32, #tpu.memory_space<vmem>>, vector<8x128xi32>
    tpu.vector_store %arg3[%c0_58, %c0_59], %131 {strides = array<i32>} : memref<8x128xi32, #tpu.memory_space<vmem>>, vector<8x128xi32>,
    return
  }
  func.func @transform_0(%arg0: i32) -> (i32, i32, i32) {
    %c0_i32 = arith.constant 0 : i32
    %c0_i32_0 = arith.constant 0 : i32
    %c0_i32_1 = arith.constant 0 : i32
    return %arg0, %c0_i32, %c0_i32_0 : i32, i32, i32
  }
  func.func @transform_1(%arg0: i32) -> (i32, i32) {
    %c0_i32 = arith.constant 0 : i32
    %c0_i32_0 = arith.constant 0 : i32
    return %arg0, %c0_i32 : i32, i32
  }
  func.func @transform_2(%arg0: i32) -> (i32, i32) {
    %c0_i32 = arith.constant 0 : i32
    %c0_i32_0 = arith.constant 0 : i32
    return %arg0, %c0_i32 : i32, i32
  }
}

</mosaic_0001>

<llo_original>
// kernel: tpu_custom_call.1
$region0: #{tpu_custom_call.1}
  #allocation0 [shape = 'u32[]', space=smem, size = 0x4, offset = 0x4, fixed_abs, tag = 'smem constant byte address 0x4 - core index']
  #allocation1 [shape = 'u32[144,128]{1,0:T(1,128)}', space=vmem, size = 0x12000, scoped, tag = 'internal scratch']
  %s0 = inlined_call_operand.hbm [shape: f32[8,8,128], index: 0, kind: input, shape index: {}]
  %s1 = inlined_call_operand.hbm [shape: f32[8,128], index: 1, kind: input, shape index: {}]
  %s2 = inlined_call_operand.hbm [shape: s32[8,128], index: 2, kind: output, shape index: {}]
  %s3 = sld [smem:[#allocation0]]
  $region26: #{tpu_custom_call.1} parent=0
    _
  %s5 = ssub.s32 1, %s3
  %s6 = scalar_select 0, %s5, %s3
  $region1: #{tpu_custom_call.1} parent=0
    #allocation2 [shape = 'u8[32768]{0}', space=vmem, size = 0x8000, scoped, tag = 'input window, operand 0, single buffered']
    #allocation3 [shape = 's32[1]{0}', space=sflag, size = 0x4, scoped, tag = 'scoped memory for tpu_custom_call.1']
    #allocation4 [shape = 's32[1]{0}', space=sflag, size = 0x4, scoped, tag = 'scoped memory for tpu_custom_call.1']
    #allocation5 [shape = 'u8[4096]{0}', space=vmem, size = 0x1000, scoped, tag = 'input window, operand 1, single buffered']
    #allocation6 [shape = 's32[1]{0}', space=sflag, size = 0x4, scoped, tag = 'scoped memory for tpu_custom_call.1']
    #allocation7 [shape = 'u8[4096]{0}', space=vmem, size = 0x1000, scoped, tag = 'output window, operand 0, single buffered']
    %7 = vsyncpa [#allocation3], 0
    %8 = vsyncpa [#allocation6], 0
    %9 = vsyncpa [#allocation4], 0
    // Predicated region
    $region2: #{tpu_custom_call.1} parent=1 // pred_check
      _
    $region3: #{tpu_custom_call.1} parent=1 // pred_check_branch
      %11 = sbr.rel (0) target = $region5
    $region4: #{tpu_custom_call.1} parent=1 // pred_region
      %s13 = ssub.s32 1024, 1024
      %14 = vsyncadd [#allocation3], %s13
      %s15 = sshll.u32 [#allocation2], 4
      %s16 = int_to_ptr.vmem [resolvable:$true] %s15
      %21 = dma.hbm_to_vmem [thread:$0]  %s0, 1024, %s16, [#allocation3], 128, 128, 8
    $region5: #{tpu_custom_call.1} parent=1 // pred_fallthru
      _
    // Predicated region
    $region6: #{tpu_custom_call.1} parent=1 // pred_check
      _
    $region7: #{tpu_custom_call.1} parent=1 // pred_check_branch
      %23 = sbr.rel (0) target = $region9
    $region8: #{tpu_custom_call.1} parent=1 // pred_region
      %s25 = ssub.s32 128, 128
      %26 = vsyncadd [#allocation6], %s25
      %s28 = sshll.u32 [#allocation5], 4
      %s29 = int_to_ptr.vmem [resolvable:$true] %s28
      %31 = dma.hbm_to_vmem [thread:$0]  %s1, 128, %s29, [#allocation6]
    $region9: #{tpu_custom_call.1} parent=1 // pred_fallthru
      _
    // Predicated region
    $region10: #{tpu_custom_call.1} parent=1 // pred_check
      _
    $region11: #{tpu_custom_call.1} parent=1 // pred_check_branch
      %33 = sbr.rel (0) target = $region13
    $region12: #{tpu_custom_call.1} parent=1 // pred_region
      %34 = dma.done [#allocation3], 1024
    $region13: #{tpu_custom_call.1} parent=1 // pred_fallthru
      _
    // Predicated region
    $region14: #{tpu_custom_call.1} parent=1 // pred_check
      _
    $region15: #{tpu_custom_call.1} parent=1 // pred_check_branch
      %36 = sbr.rel (0) target = $region17
    $region16: #{tpu_custom_call.1} parent=1 // pred_region
      %37 = dma.done [#allocation6], 128
    $region17: #{tpu_custom_call.1} parent=1 // pred_fallthru
      _
    %v38 = vld [vmem:[#allocation2] sm:$0x1]
    %v39 = vld [vmem:[#allocation2 + $0x8] sm:$0x1]
    %v40 = vld [vmem:[#allocation2 + $0x10] sm:$0x1]
    %v41 = vld [vmem:[#allocation2 + $0x18] sm:$0x1]
    %v42 = vld [vmem:[#allocation2 + $0x20] sm:$0x1]
    %v43 = vld [vmem:[#allocation2 + $0x28] sm:$0x1]
    %v44 = vld [vmem:[#allocation2 + $0x30] sm:$0x1]
    %v45 = vld [vmem:[#allocation2 + $0x38] sm:$0x1]
    %v46 = vmul.f32 %v38, 7.0
    %v47 = vmul.f32 %v39, 7.0
    %v48 = vmul.f32 %v40, 7.0
    %v49 = vmul.f32 %v41, 7.0
    %v50 = vmul.f32 %v42, 7.0
    %v51 = vmul.f32 %v43, 7.0
    %v52 = vmul.f32 %v44, 7.0
    %v53 = vmul.f32 %v45, 7.0
    %v54 = vld [vmem:[#allocation2 + $0x1] sm:$0x1]
    %v55 = vld [vmem:[#allocation2 + $0x9] sm:$0x1]
    %v56 = vld [vmem:[#allocation2 + $0x11] sm:$0x1]
    %v57 = vld [vmem:[#allocation2 + $0x19] sm:$0x1]
    %v58 = vld [vmem:[#allocation2 + $0x21] sm:$0x1]
    %v59 = vld [vmem:[#allocation2 + $0x29] sm:$0x1]
    %v60 = vld [vmem:[#allocation2 + $0x31] sm:$0x1]
    %v61 = vld [vmem:[#allocation2 + $0x39] sm:$0x1]
    %v62 = vmul.f32 %v54, 7.0
    %v63 = vmul.f32 %v55, 7.0
    %v64 = vmul.f32 %v56, 7.0
    %v65 = vmul.f32 %v57, 7.0
    %v66 = vmul.f32 %v58, 7.0
    %v67 = vmul.f32 %v59, 7.0
    %v68 = vmul.f32 %v60, 7.0
    %v69 = vmul.f32 %v61, 7.0
    %v70 = vmax.f32 %v46, %v62
    %v71 = vmax.f32 %v47, %v63
    %v72 = vmax.f32 %v48, %v64
    %v73 = vmax.f32 %v49, %v65
    %v74 = vmax.f32 %v50, %v66
    %v75 = vmax.f32 %v51, %v67
    %v76 = vmax.f32 %v52, %v68
    %v77 = vmax.f32 %v53, %v69
    %v78 = vld [vmem:[#allocation2 + $0x2] sm:$0x1]
    %v79 = vld [vmem:[#allocation2 + $0xa] sm:$0x1]
    %v80 = vld [vmem:[#allocation2 + $0x12] sm:$0x1]
    %v81 = vld [vmem:[#allocation2 + $0x1a] sm:$0x1]
    %v82 = vld [vmem:[#allocation2 + $0x22] sm:$0x1]
    %v83 = vld [vmem:[#allocation2 + $0x2a] sm:$0x1]
    %v84 = vld [vmem:[#allocation2 + $0x32] sm:$0x1]
    %v85 = vld [vmem:[#allocation2 + $0x3a] sm:$0x1]
    %v86 = vmul.f32 %v78, 7.0
    %v87 = vmul.f32 %v79, 7.0
    %v88 = vmul.f32 %v80, 7.0
    %v89 = vmul.f32 %v81, 7.0
    %v90 = vmul.f32 %v82, 7.0
    %v91 = vmul.f32 %v83, 7.0
    %v92 = vmul.f32 %v84, 7.0
    %v93 = vmul.f32 %v85, 7.0
    %v94 = vmax.f32 %v70, %v86
    %v95 = vmax.f32 %v71, %v87
    %v96 = vmax.f32 %v72, %v88
    %v97 = vmax.f32 %v73, %v89
    %v98 = vmax.f32 %v74, %v90
    %v99 = vmax.f32 %v75, %v91
    %v100 = vmax.f32 %v76, %v92
    %v101 = vmax.f32 %v77, %v93
    %v102 = vld [vmem:[#allocation2 + $0x3] sm:$0x1]
    %v103 = vld [vmem:[#allocation2 + $0xb] sm:$0x1]
    %v104 = vld [vmem:[#allocation2 + $0x13] sm:$0x1]
    %v105 = vld [vmem:[#allocation2 + $0x1b] sm:$0x1]
    %v106 = vld [vmem:[#allocation2 + $0x23] sm:$0x1]
    %v107 = vld [vmem:[#allocation2 + $0x2b] sm:$0x1]
    %v108 = vld [vmem:[#allocation2 + $0x33] sm:$0x1]
    %v109 = vld [vmem:[#allocation2 + $0x3b] sm:$0x1]
    %v110 = vmul.f32 %v102, 7.0
    %v111 = vmul.f32 %v103, 7.0
    %v112 = vmul.f32 %v104, 7.0
    %v113 = vmul.f32 %v105, 7.0
    %v114 = vmul.f32 %v106, 7.0
    %v115 = vmul.f32 %v107, 7.0
    %v116 = vmul.f32 %v108, 7.0
    %v117 = vmul.f32 %v109, 7.0
    %v118 = vmax.f32 %v94, %v110
    %v119 = vmax.f32 %v95, %v111
    %v120 = vmax.f32 %v96, %v112
    %v121 = vmax.f32 %v97, %v113
    %v122 = vmax.f32 %v98, %v114
    %v123 = vmax.f32 %v99, %v115
    %v124 = vmax.f32 %v100, %v116
    %v125 = vmax.f32 %v101, %v117
    %v126 = vld [vmem:[#allocation2 + $0x4] sm:$0x1]
    %v127 = vld [vmem:[#allocation2 + $0xc] sm:$0x1]
    %v128 = vld [vmem:[#allocation2 + $0x14] sm:$0x1]
    %v129 = vld [vmem:[#allocation2 + $0x1c] sm:$0x1]
    %v130 = vld [vmem:[#allocation2 + $0x24] sm:$0x1]
    %v131 = vld [vmem:[#allocation2 + $0x2c] sm:$0x1]
    %v132 = vld [vmem:[#allocation2 + $0x34] sm:$0x1]
    %v133 = vld [vmem:[#allocation2 + $0x3c] sm:$0x1]
    %v134 = vmul.f32 %v126, 7.0
    %v135 = vmul.f32 %v127, 7.0
    %v136 = vmul.f32 %v128, 7.0
    %v137 = vmul.f32 %v129, 7.0
    %v138 = vmul.f32 %v130, 7.0
    %v139 = vmul.f32 %v131, 7.0
    %v140 = vmul.f32 %v132, 7.0
    %v141 = vmul.f32 %v133, 7.0
    %v142 = vmax.f32 %v118, %v134
    %v143 = vmax.f32 %v119, %v135
    %v144 = vmax.f32 %v120, %v136
    %v145 = vmax.f32 %v121, %v137
    %v146 = vmax.f32 %v122, %v138
    %v147 = vmax.f32 %v123, %v139
    %v148 = vmax.f32 %v124, %v140
    %v149 = vmax.f32 %v125, %v141
    %v150 = vld [vmem:[#allocation2 + $0x5] sm:$0x1]
    %v151 = vld [vmem:[#allocation2 + $0xd] sm:$0x1]
    %v152 = vld [vmem:[#allocation2 + $0x15] sm:$0x1]
    %v153 = vld [vmem:[#allocation2 + $0x1d] sm:$0x1]
    %v154 = vld [vmem:[#allocation2 + $0x25] sm:$0x1]
    %v155 = vld [vmem:[#allocation2 + $0x2d] sm:$0x1]
    %v156 = vld [vmem:[#allocation2 + $0x35] sm:$0x1]
    %v157 = vld [vmem:[#allocation2 + $0x3d] sm:$0x1]
    %v158 = vmul.f32 %v150, 7.0
    %v159 = vmul.f32 %v151, 7.0
    %v160 = vmul.f32 %v152, 7.0
    %v161 = vmul.f32 %v153, 7.0
    %v162 = vmul.f32 %v154, 7.0
    %v163 = vmul.f32 %v155, 7.0
    %v164 = vmul.f32 %v156, 7.0
    %v165 = vmul.f32 %v157, 7.0
    %v166 = vmax.f32 %v142, %v158
    %v167 = vmax.f32 %v143, %v159
    %v168 = vmax.f32 %v144, %v160
    %v169 = vmax.f32 %v145, %v161
    %v170 = vmax.f32 %v146, %v162
    %v171 = vmax.f32 %v147, %v163
    %v172 = vmax.f32 %v148, %v164
    %v173 = vmax.f32 %v149, %v165
    %v174 = vld [vmem:[#allocation2 + $0x6] sm:$0x1]
    %v175 = vld [vmem:[#allocation2 + $0xe] sm:$0x1]
    %v176 = vld [vmem:[#allocation2 + $0x16] sm:$0x1]
    %v177 = vld [vmem:[#allocation2 + $0x1e] sm:$0x1]
    %v178 = vld [vmem:[#allocation2 + $0x26] sm:$0x1]
    %v179 = vld [vmem:[#allocation2 + $0x2e] sm:$0x1]
    %v180 = vld [vmem:[#allocation2 + $0x36] sm:$0x1]
    %v181 = vld [vmem:[#allocation2 + $0x3e] sm:$0x1]
    %v182 = vmul.f32 %v174, 7.0
    %v183 = vmul.f32 %v175, 7.0
    %v184 = vmul.f32 %v176, 7.0
    %v185 = vmul.f32 %v177, 7.0
    %v186 = vmul.f32 %v178, 7.0
    %v187 = vmul.f32 %v179, 7.0
    %v188 = vmul.f32 %v180, 7.0
    %v189 = vmul.f32 %v181, 7.0
    %v190 = vmax.f32 %v166, %v182
    %v191 = vmax.f32 %v167, %v183
    %v192 = vmax.f32 %v168, %v184
    %v193 = vmax.f32 %v169, %v185
    %v194 = vmax.f32 %v170, %v186
    %v195 = vmax.f32 %v171, %v187
    %v196 = vmax.f32 %v172, %v188
    %v197 = vmax.f32 %v173, %v189
    %v198 = vld [vmem:[#allocation2 + $0x7] sm:$0x1]
    %v199 = vld [vmem:[#allocation2 + $0xf] sm:$0x1]
    %v200 = vld [vmem:[#allocation2 + $0x17] sm:$0x1]
    %v201 = vld [vmem:[#allocation2 + $0x1f] sm:$0x1]
    %v202 = vld [vmem:[#allocation2 + $0x27] sm:$0x1]
    %v203 = vld [vmem:[#allocation2 + $0x2f] sm:$0x1]
    %v204 = vld [vmem:[#allocation2 + $0x37] sm:$0x1]
    %v205 = vld [vmem:[#allocation2 + $0x3f] sm:$0x1]
    %v206 = vmul.f32 %v198, 7.0
    %v207 = vmul.f32 %v199, 7.0
    %v208 = vmul.f32 %v200, 7.0
    %v209 = vmul.f32 %v201, 7.0
    %v210 = vmul.f32 %v202, 7.0
    %v211 = vmul.f32 %v203, 7.0
    %v212 = vmul.f32 %v204, 7.0
    %v213 = vmul.f32 %v205, 7.0
    %v214 = vmax.f32 %v190, %v206
    %v215 = vmax.f32 %v191, %v207
    %v216 = vmax.f32 %v192, %v208
    %v217 = vmax.f32 %v193, %v209
    %v218 = vmax.f32 %v194, %v210
    %v219 = vmax.f32 %v195, %v211
    %v220 = vmax.f32 %v196, %v212
    %v221 = vmax.f32 %v197, %v213
    %v222 = vsub.f32 %v46, %v214
    %v223 = vsub.f32 %v47, %v215
    %v224 = vsub.f32 %v48, %v216
    %v225 = vsub.f32 %v49, %v217
    %v226 = vsub.f32 %v50, %v218
    %v227 = vsub.f32 %v51, %v219
    %v228 = vsub.f32 %v52, %v220
    %v229 = vsub.f32 %v53, %v221
    %v230 = vmul.f32 %v222, 1.442695
    %v231 = vpow.pop %v230
    %v232 = vmul.f32 %v223, 1.442695
    %v233 = vpow.pop %v232
    %v234 = vmul.f32 %v224, 1.442695
    %v235 = vpow.pop %v234
    %v236 = vmul.f32 %v225, 1.442695
    %v237 = vpow.pop %v236
    %v238 = vmul.f32 %v226, 1.442695
    %v239 = vpow.pop %v238
    %v240 = vmul.f32 %v227, 1.442695
    %v241 = vpow.pop %v240
    %v242 = vmul.f32 %v228, 1.442695
    %v243 = vpow.pop %v242
    %v244 = vmul.f32 %v229, 1.442695
    %v245 = vpow.pop %v244
    %v246 = vsub.f32 %v62, %v214
    %v247 = vsub.f32 %v63, %v215
    %v248 = vsub.f32 %v64, %v216
    %v249 = vsub.f32 %v65, %v217
    %v250 = vsub.f32 %v66, %v218
    %v251 = vsub.f32 %v67, %v219
    %v252 = vsub.f32 %v68, %v220
    %v253 = vsub.f32 %v69, %v221
    %v254 = vmul.f32 %v246, 1.442695
    %v255 = vpow.pop %v254
    %v256 = vmul.f32 %v247, 1.442695
    %v257 = vpow.pop %v256
    %v258 = vmul.f32 %v248, 1.442695
    %v259 = vpow.pop %v258
    %v260 = vmul.f32 %v249, 1.442695
    %v261 = vpow.pop %v260
    %v262 = vmul.f32 %v250, 1.442695
    %v263 = vpow.pop %v262
    %v264 = vmul.f32 %v251, 1.442695
    %v265 = vpow.pop %v264
    %v266 = vmul.f32 %v252, 1.442695
    %v267 = vpow.pop %v266
    %v268 = vmul.f32 %v253, 1.442695
    %v269 = vpow.pop %v268
    %v270 = vsub.f32 %v86, %v214
    %v271 = vsub.f32 %v87, %v215
    %v272 = vsub.f32 %v88, %v216
    %v273 = vsub.f32 %v89, %v217
    %v274 = vsub.f32 %v90, %v218
    %v275 = vsub.f32 %v91, %v219
    %v276 = vsub.f32 %v92, %v220
    %v277 = vsub.f32 %v93, %v221
    %v278 = vmul.f32 %v270, 1.442695
    %v279 = vpow.pop %v278
    %v280 = vmul.f32 %v271, 1.442695
    %v281 = vpow.pop %v280
    %v282 = vmul.f32 %v272, 1.442695
    %v283 = vpow.pop %v282
    %v284 = vmul.f32 %v273, 1.442695
    %v285 = vpow.pop %v284
    %v286 = vmul.f32 %v274, 1.442695
    %v287 = vpow.pop %v286
    %v288 = vmul.f32 %v275, 1.442695
    %v289 = vpow.pop %v288
    %v290 = vmul.f32 %v276, 1.442695
    %v291 = vpow.pop %v290
    %v292 = vmul.f32 %v277, 1.442695
    %v293 = vpow.pop %v292
    %v294 = vsub.f32 %v110, %v214
    %v295 = vsub.f32 %v111, %v215
    %v296 = vsub.f32 %v112, %v216
    %v297 = vsub.f32 %v113, %v217
    %v298 = vsub.f32 %v114, %v218
    %v299 = vsub.f32 %v115, %v219
    %v300 = vsub.f32 %v116, %v220
    %v301 = vsub.f32 %v117, %v221
    %v302 = vmul.f32 %v294, 1.442695
    %v303 = vpow.pop %v302
    %v304 = vmul.f32 %v295, 1.442695
    %v305 = vpow.pop %v304
    %v306 = vmul.f32 %v296, 1.442695
    %v307 = vpow.pop %v306
    %v308 = vmul.f32 %v297, 1.442695
    %v309 = vpow.pop %v308
    %v310 = vmul.f32 %v298, 1.442695
    %v311 = vpow.pop %v310
    %v312 = vmul.f32 %v299, 1.442695
    %v313 = vpow.pop %v312
    %v314 = vmul.f32 %v300, 1.442695
    %v315 = vpow.pop %v314
    %v316 = vmul.f32 %v301, 1.442695
    %v317 = vpow.pop %v316
    %v318 = vsub.f32 %v134, %v214
    %v319 = vsub.f32 %v135, %v215
    %v320 = vsub.f32 %v136, %v216
    %v321 = vsub.f32 %v137, %v217
    %v322 = vsub.f32 %v138, %v218
    %v323 = vsub.f32 %v139, %v219
    %v324 = vsub.f32 %v140, %v220
    %v325 = vsub.f32 %v141, %v221
    %v326 = vmul.f32 %v318, 1.442695
    %v327 = vpow.pop %v326
    %v328 = vmul.f32 %v319, 1.442695
    %v329 = vpow.pop %v328
    %v330 = vmul.f32 %v320, 1.442695
    %v331 = vpow.pop %v330
    %v332 = vmul.f32 %v321, 1.442695
    %v333 = vpow.pop %v332
    %v334 = vmul.f32 %v322, 1.442695
    %v335 = vpow.pop %v334
    %v336 = vmul.f32 %v323, 1.442695
    %v337 = vpow.pop %v336
    %v338 = vmul.f32 %v324, 1.442695
    %v339 = vpow.pop %v338
    %v340 = vmul.f32 %v325, 1.442695
    %v341 = vpow.pop %v340
    %v342 = vsub.f32 %v158, %v214
    %v343 = vsub.f32 %v159, %v215
    %v344 = vsub.f32 %v160, %v216
    %v345 = vsub.f32 %v161, %v217
    %v346 = vsub.f32 %v162, %v218
    %v347 = vsub.f32 %v163, %v219
    %v348 = vsub.f32 %v164, %v220
    %v349 = vsub.f32 %v165, %v221
    %v350 = vmul.f32 %v342, 1.442695
    %v351 = vpow.pop %v350
    %v352 = vmul.f32 %v343, 1.442695
    %v353 = vpow.pop %v352
    %v354 = vmul.f32 %v344, 1.442695
    %v355 = vpow.pop %v354
    %v356 = vmul.f32 %v345, 1.442695
    %v357 = vpow.pop %v356
    %v358 = vmul.f32 %v346, 1.442695
    %v359 = vpow.pop %v358
    %v360 = vmul.f32 %v347, 1.442695
    %v361 = vpow.pop %v360
    %v362 = vmul.f32 %v348, 1.442695
    %v363 = vpow.pop %v362
    %v364 = vmul.f32 %v349, 1.442695
    %v365 = vpow.pop %v364
    %v366 = vsub.f32 %v182, %v214
    %v367 = vsub.f32 %v183, %v215
    %v368 = vsub.f32 %v184, %v216
    %v369 = vsub.f32 %v185, %v217
    %v370 = vsub.f32 %v186, %v218
    %v371 = vsub.f32 %v187, %v219
    %v372 = vsub.f32 %v188, %v220
    %v373 = vsub.f32 %v189, %v221
    %v374 = vmul.f32 %v366, 1.442695
    %v375 = vpow.pop %v374
    %v376 = vmul.f32 %v367, 1.442695
    %v377 = vpow.pop %v376
    %v378 = vmul.f32 %v368, 1.442695
    %v379 = vpow.pop %v378
    %v380 = vmul.f32 %v369, 1.442695
    %v381 = vpow.pop %v380
    %v382 = vmul.f32 %v370, 1.442695
    %v383 = vpow.pop %v382
    %v384 = vmul.f32 %v371, 1.442695
    %v385 = vpow.pop %v384
    %v386 = vmul.f32 %v372, 1.442695
    %v387 = vpow.pop %v386
    %v388 = vmul.f32 %v373, 1.442695
    %v389 = vpow.pop %v388
    %v390 = vsub.f32 %v206, %v214
    %v391 = vsub.f32 %v207, %v215
    %v392 = vsub.f32 %v208, %v216
    %v393 = vsub.f32 %v209, %v217
    %v394 = vsub.f32 %v210, %v218
    %v395 = vsub.f32 %v211, %v219
    %v396 = vsub.f32 %v212, %v220
    %v397 = vsub.f32 %v213, %v221
    %v398 = vmul.f32 %v390, 1.442695
    %v399 = vpow.pop %v398
    %v400 = vmul.f32 %v391, 1.442695
    %v401 = vpow.pop %v400
    %v402 = vmul.f32 %v392, 1.442695
    %v403 = vpow.pop %v402
    %v404 = vmul.f32 %v393, 1.442695
    %v405 = vpow.pop %v404
    %v406 = vmul.f32 %v394, 1.442695
    %v407 = vpow.pop %v406
    %v408 = vmul.f32 %v395, 1.442695
    %v409 = vpow.pop %v408
    %v410 = vmul.f32 %v396, 1.442695
    %v411 = vpow.pop %v410
    %v412 = vmul.f32 %v397, 1.442695
    %v413 = vpow.pop %v412
    %v414 = vadd.f32 %v231, %v255
    %v415 = vadd.f32 %v233, %v257
    %v416 = vadd.f32 %v235, %v259
    %v417 = vadd.f32 %v237, %v261
    %v418 = vadd.f32 %v239, %v263
    %v419 = vadd.f32 %v241, %v265
    %v420 = vadd.f32 %v243, %v267
    %v421 = vadd.f32 %v245, %v269
    %v422 = vadd.f32 %v414, %v279
    %v423 = vadd.f32 %v415, %v281
    %v424 = vadd.f32 %v416, %v283
    %v425 = vadd.f32 %v417, %v285
    %v426 = vadd.f32 %v418, %v287
    %v427 = vadd.f32 %v419, %v289
    %v428 = vadd.f32 %v420, %v291
    %v429 = vadd.f32 %v421, %v293
    %v430 = vadd.f32 %v422, %v303
    %v431 = vadd.f32 %v423, %v305
    %v432 = vadd.f32 %v424, %v307
    %v433 = vadd.f32 %v425, %v309
    %v434 = vadd.f32 %v426, %v311
    %v435 = vadd.f32 %v427, %v313
    %v436 = vadd.f32 %v428, %v315
    %v437 = vadd.f32 %v429, %v317
    %v438 = vadd.f32 %v430, %v327
    %v439 = vadd.f32 %v431, %v329
    %v440 = vadd.f32 %v432, %v331
    %v441 = vadd.f32 %v433, %v333
    %v442 = vadd.f32 %v434, %v335
    %v443 = vadd.f32 %v435, %v337
    %v444 = vadd.f32 %v436, %v339
    %v445 = vadd.f32 %v437, %v341
    %v446 = vadd.f32 %v438, %v351
    %v447 = vadd.f32 %v439, %v353
    %v448 = vadd.f32 %v440, %v355
    %v449 = vadd.f32 %v441, %v357
    %v450 = vadd.f32 %v442, %v359
    %v451 = vadd.f32 %v443, %v361
    %v452 = vadd.f32 %v444, %v363
    %v453 = vadd.f32 %v445, %v365
    %v454 = vadd.f32 %v446, %v375
    %v455 = vadd.f32 %v447, %v377
    %v456 = vadd.f32 %v448, %v379
    %v457 = vadd.f32 %v449, %v381
    %v458 = vadd.f32 %v450, %v383
    %v459 = vadd.f32 %v451, %v385
    %v460 = vadd.f32 %v452, %v387
    %v461 = vadd.f32 %v453, %v389
    %v462 = vadd.f32 %v454, %v399
    %v463 = vadd.f32 %v455, %v401
    %v464 = vadd.f32 %v456, %v403
    %v465 = vadd.f32 %v457, %v405
    %v466 = vadd.f32 %v458, %v407
    %v467 = vadd.f32 %v459, %v409
    %v468 = vadd.f32 %v460, %v411
    %v469 = vadd.f32 %v461, %v413
    %v470 = vld [vmem:[#allocation5] sm:$0xff]
    %v479 = vrot.slane %v463, 7
    %vm480 = vcmask 1041409
    %v481 = vsel %vm480, %v479, %v462
    %v482 = vrot.slane %v464, 6
    %vm483 = vcmask 1042434
    %v484 = vsel %vm483, %v482, %v481
    %v485 = vrot.slane %v465, 5
    %vm486 = vcmask 1043459
    %v487 = vsel %vm486, %v485, %v484
    %v488 = vrot.slane %v466, 4
    %vm489 = vcmask 1044484
    %v490 = vsel %vm489, %v488, %v487
    %v491 = vrot.slane %v467, 3
    %vm492 = vcmask 1045509
    %v493 = vsel %vm492, %v491, %v490
    %v494 = vrot.slane %v468, 2
    %vm495 = vcmask 1046534
    %v496 = vsel %vm495, %v494, %v493
    %v497 = vrot.slane %v469, 1
    %vm498 = vcmask 1047559
    %v499 = vsel %vm498, %v497, %v496
    %v501 = vmul.f32 %v470, %v499
    %v502 = vadd.f32 %v231, 0.0
    %v503 = vadd.f32 %v233, 0.0
    %v504 = vadd.f32 %v235, 0.0
    %v505 = vadd.f32 %v237, 0.0
    %v506 = vadd.f32 %v239, 0.0
    %v507 = vadd.f32 %v241, 0.0
    %v508 = vadd.f32 %v243, 0.0
    %v509 = vadd.f32 %v245, 0.0
    %v511 = vrot.slane %v501, 1
    %v512 = vrot.slane %v501, 2
    %v513 = vrot.slane %v501, 3
    %v514 = vrot.slane %v501, 4
    %v515 = vrot.slane %v501, 5
    %v516 = vrot.slane %v501, 6
    %v517 = vrot.slane %v501, 7
    %vm526 = vcmp.le.f32.partialorder %v502, %v501
    %vm527 = vcmp.le.f32.partialorder %v503, %v511
    %vm528 = vcmp.le.f32.partialorder %v504, %v512
    %vm529 = vcmp.le.f32.partialorder %v505, %v513
    %vm530 = vcmp.le.f32.partialorder %v506, %v514
    %vm531 = vcmp.le.f32.partialorder %v507, %v515
    %vm532 = vcmp.le.f32.partialorder %v508, %v516
    %vm533 = vcmp.le.f32.partialorder %v509, %v517
    %v534 = vsel %vm526, 1, 0
    %v535 = vsel %vm527, 1, 0
    %v536 = vsel %vm528, 1, 0
    %v537 = vsel %vm529, 1, 0
    %v538 = vsel %vm530, 1, 0
    %v539 = vsel %vm531, 1, 0
    %v540 = vsel %vm532, 1, 0
    %v541 = vsel %vm533, 1, 0
    %v542 = vadd.f32 %v502, %v255
    %v543 = vadd.f32 %v503, %v257
    %v544 = vadd.f32 %v504, %v259
    %v545 = vadd.f32 %v505, %v261
    %v546 = vadd.f32 %v506, %v263
    %v547 = vadd.f32 %v507, %v265
    %v548 = vadd.f32 %v508, %v267
    %v549 = vadd.f32 %v509, %v269
    %vm550 = vcmp.le.f32.partialorder %v542, %v501
    %vm551 = vcmp.le.f32.partialorder %v543, %v511
    %vm552 = vcmp.le.f32.partialorder %v544, %v512
    %vm553 = vcmp.le.f32.partialorder %v545, %v513
    %vm554 = vcmp.le.f32.partialorder %v546, %v514
    %vm555 = vcmp.le.f32.partialorder %v547, %v515
    %vm556 = vcmp.le.f32.partialorder %v548, %v516
    %vm557 = vcmp.le.f32.partialorder %v549, %v517
    %v558 = vsel %vm550, 1, 0
    %v559 = vsel %vm551, 1, 0
    %v560 = vsel %vm552, 1, 0
    %v561 = vsel %vm553, 1, 0
    %v562 = vsel %vm554, 1, 0
    %v563 = vsel %vm555, 1, 0
    %v564 = vsel %vm556, 1, 0
    %v565 = vsel %vm557, 1, 0
    %v566 = vadd.s32 %v534, %v558
    %v567 = vadd.s32 %v535, %v559
    %v568 = vadd.s32 %v536, %v560
    %v569 = vadd.s32 %v537, %v561
    %v570 = vadd.s32 %v538, %v562
    %v571 = vadd.s32 %v539, %v563
    %v572 = vadd.s32 %v540, %v564
    %v573 = vadd.s32 %v541, %v565
    %v574 = vadd.f32 %v542, %v279
    %v575 = vadd.f32 %v543, %v281
    %v576 = vadd.f32 %v544, %v283
    %v577 = vadd.f32 %v545, %v285
    %v578 = vadd.f32 %v546, %v287
    %v579 = vadd.f32 %v547, %v289
    %v580 = vadd.f32 %v548, %v291
    %v581 = vadd.f32 %v549, %v293
    %vm582 = vcmp.le.f32.partialorder %v574, %v501
    %vm583 = vcmp.le.f32.partialorder %v575, %v511
    %vm584 = vcmp.le.f32.partialorder %v576, %v512
    %vm585 = vcmp.le.f32.partialorder %v577, %v513
    %vm586 = vcmp.le.f32.partialorder %v578, %v514
    %vm587 = vcmp.le.f32.partialorder %v579, %v515
    %vm588 = vcmp.le.f32.partialorder %v580, %v516
    %vm589 = vcmp.le.f32.partialorder %v581, %v517
    %v590 = vsel %vm582, 1, 0
    %v591 = vsel %vm583, 1, 0
    %v592 = vsel %vm584, 1, 0
    %v593 = vsel %vm585, 1, 0
    %v594 = vsel %vm586, 1, 0
    %v595 = vsel %vm587, 1, 0
    %v596 = vsel %vm588, 1, 0
    %v597 = vsel %vm589, 1, 0
    %v598 = vadd.s32 %v566, %v590
    %v599 = vadd.s32 %v567, %v591
    %v600 = vadd.s32 %v568, %v592
    %v601 = vadd.s32 %v569, %v593
    %v602 = vadd.s32 %v570, %v594
    %v603 = vadd.s32 %v571, %v595
    %v604 = vadd.s32 %v572, %v596
    %v605 = vadd.s32 %v573, %v597
    %v606 = vadd.f32 %v574, %v303
    %v607 = vadd.f32 %v575, %v305
    %v608 = vadd.f32 %v576, %v307
    %v609 = vadd.f32 %v577, %v309
    %v610 = vadd.f32 %v578, %v311
    %v611 = vadd.f32 %v579, %v313
    %v612 = vadd.f32 %v580, %v315
    %v613 = vadd.f32 %v581, %v317
    %vm614 = vcmp.le.f32.partialorder %v606, %v501
    %vm615 = vcmp.le.f32.partialorder %v607, %v511
    %vm616 = vcmp.le.f32.partialorder %v608, %v512
    %vm617 = vcmp.le.f32.partialorder %v609, %v513
    %vm618 = vcmp.le.f32.partialorder %v610, %v514
    %vm619 = vcmp.le.f32.partialorder %v611, %v515
    %vm620 = vcmp.le.f32.partialorder %v612, %v516
    %vm621 = vcmp.le.f32.partialorder %v613, %v517
    %v622 = vsel %vm614, 1, 0
    %v623 = vsel %vm615, 1, 0
    %v624 = vsel %vm616, 1, 0
    %v625 = vsel %vm617, 1, 0
    %v626 = vsel %vm618, 1, 0
    %v627 = vsel %vm619, 1, 0
    %v628 = vsel %vm620, 1, 0
    %v629 = vsel %vm621, 1, 0
    %v630 = vadd.s32 %v598, %v622
    %v631 = vadd.s32 %v599, %v623
    %v632 = vadd.s32 %v600, %v624
    %v633 = vadd.s32 %v601, %v625
    %v634 = vadd.s32 %v602, %v626
    %v635 = vadd.s32 %v603, %v627
    %v636 = vadd.s32 %v604, %v628
    %v637 = vadd.s32 %v605, %v629
    %v638 = vadd.f32 %v606, %v327
    %v639 = vadd.f32 %v607, %v329
    %v640 = vadd.f32 %v608, %v331
    %v641 = vadd.f32 %v609, %v333
    %v642 = vadd.f32 %v610, %v335
    %v643 = vadd.f32 %v611, %v337
    %v644 = vadd.f32 %v612, %v339
    %v645 = vadd.f32 %v613, %v341
    %vm646 = vcmp.le.f32.partialorder %v638, %v501
    %vm647 = vcmp.le.f32.partialorder %v639, %v511
    %vm648 = vcmp.le.f32.partialorder %v640, %v512
    %vm649 = vcmp.le.f32.partialorder %v641, %v513
    %vm650 = vcmp.le.f32.partialorder %v642, %v514
    %vm651 = vcmp.le.f32.partialorder %v643, %v515
    %vm652 = vcmp.le.f32.partialorder %v644, %v516
    %vm653 = vcmp.le.f32.partialorder %v645, %v517
    %v654 = vsel %vm646, 1, 0
    %v655 = vsel %vm647, 1, 0
    %v656 = vsel %vm648, 1, 0
    %v657 = vsel %vm649, 1, 0
    %v658 = vsel %vm650, 1, 0
    %v659 = vsel %vm651, 1, 0
    %v660 = vsel %vm652, 1, 0
    %v661 = vsel %vm653, 1, 0
    %v662 = vadd.s32 %v630, %v654
    %v663 = vadd.s32 %v631, %v655
    %v664 = vadd.s32 %v632, %v656
    %v665 = vadd.s32 %v633, %v657
    %v666 = vadd.s32 %v634, %v658
    %v667 = vadd.s32 %v635, %v659
    %v668 = vadd.s32 %v636, %v660
    %v669 = vadd.s32 %v637, %v661
    %v670 = vadd.f32 %v638, %v351
    %v671 = vadd.f32 %v639, %v353
    %v672 = vadd.f32 %v640, %v355
    %v673 = vadd.f32 %v641, %v357
    %v674 = vadd.f32 %v642, %v359
    %v675 = vadd.f32 %v643, %v361
    %v676 = vadd.f32 %v644, %v363
    %v677 = vadd.f32 %v645, %v365
    %vm678 = vcmp.le.f32.partialorder %v670, %v501
    %vm679 = vcmp.le.f32.partialorder %v671, %v511
    %vm680 = vcmp.le.f32.partialorder %v672, %v512
    %vm681 = vcmp.le.f32.partialorder %v673, %v513
    %vm682 = vcmp.le.f32.partialorder %v674, %v514
    %vm683 = vcmp.le.f32.partialorder %v675, %v515
    %vm684 = vcmp.le.f32.partialorder %v676, %v516
    %vm685 = vcmp.le.f32.partialorder %v677, %v517
    %v686 = vsel %vm678, 1, 0
    %v687 = vsel %vm679, 1, 0
    %v688 = vsel %vm680, 1, 0
    %v689 = vsel %vm681, 1, 0
    %v690 = vsel %vm682, 1, 0
    %v691 = vsel %vm683, 1, 0
    %v692 = vsel %vm684, 1, 0
    %v693 = vsel %vm685, 1, 0
    %v694 = vadd.s32 %v662, %v686
    %v695 = vadd.s32 %v663, %v687
    %v696 = vadd.s32 %v664, %v688
    %v697 = vadd.s32 %v665, %v689
    %v698 = vadd.s32 %v666, %v690
    %v699 = vadd.s32 %v667, %v691
    %v700 = vadd.s32 %v668, %v692
    %v701 = vadd.s32 %v669, %v693
    %v702 = vadd.f32 %v670, %v375
    %v703 = vadd.f32 %v671, %v377
    %v704 = vadd.f32 %v672, %v379
    %v705 = vadd.f32 %v673, %v381
    %v706 = vadd.f32 %v674, %v383
    %v707 = vadd.f32 %v675, %v385
    %v708 = vadd.f32 %v676, %v387
    %v709 = vadd.f32 %v677, %v389
    %vm710 = vcmp.le.f32.partialorder %v702, %v501
    %vm711 = vcmp.le.f32.partialorder %v703, %v511
    %vm712 = vcmp.le.f32.partialorder %v704, %v512
    %vm713 = vcmp.le.f32.partialorder %v705, %v513
    %vm714 = vcmp.le.f32.partialorder %v706, %v514
    %vm715 = vcmp.le.f32.partialorder %v707, %v515
    %vm716 = vcmp.le.f32.partialorder %v708, %v516
    %vm717 = vcmp.le.f32.partialorder %v709, %v517
    %v718 = vsel %vm710, 1, 0
    %v719 = vsel %vm711, 1, 0
    %v720 = vsel %vm712, 1, 0
    %v721 = vsel %vm713, 1, 0
    %v722 = vsel %vm714, 1, 0
    %v723 = vsel %vm715, 1, 0
    %v724 = vsel %vm716, 1, 0
    %v725 = vsel %vm717, 1, 0
    %v726 = vadd.s32 %v694, %v718
    %v727 = vadd.s32 %v695, %v719
    %v728 = vadd.s32 %v696, %v720
    %v729 = vadd.s32 %v697, %v721
    %v730 = vadd.s32 %v698, %v722
    %v731 = vadd.s32 %v699, %v723
    %v732 = vadd.s32 %v700, %v724
    %v733 = vadd.s32 %v701, %v725
    %v734 = vadd.f32 %v702, %v399
    %v735 = vadd.f32 %v703, %v401
    %v736 = vadd.f32 %v704, %v403
    %v737 = vadd.f32 %v705, %v405
    %v738 = vadd.f32 %v706, %v407
    %v739 = vadd.f32 %v707, %v409
    %v740 = vadd.f32 %v708, %v411
    %v741 = vadd.f32 %v709, %v413
    %vm742 = vcmp.le.f32.partialorder %v734, %v501
    %vm743 = vcmp.le.f32.partialorder %v735, %v511
    %vm744 = vcmp.le.f32.partialorder %v736, %v512
    %vm745 = vcmp.le.f32.partialorder %v737, %v513
    %vm746 = vcmp.le.f32.partialorder %v738, %v514
    %vm747 = vcmp.le.f32.partialorder %v739, %v515
    %vm748 = vcmp.le.f32.partialorder %v740, %v516
    %vm749 = vcmp.le.f32.partialorder %v741, %v517
    %v750 = vsel %vm742, 1, 0
    %v751 = vsel %vm743, 1, 0
    %v752 = vsel %vm744, 1, 0
    %v753 = vsel %vm745, 1, 0
    %v754 = vsel %vm746, 1, 0
    %v755 = vsel %vm747, 1, 0
    %v756 = vsel %vm748, 1, 0
    %v757 = vsel %vm749, 1, 0
    %v758 = vadd.s32 %v726, %v750
    %v759 = vadd.s32 %v727, %v751
    %v760 = vadd.s32 %v728, %v752
    %v761 = vadd.s32 %v729, %v753
    %v762 = vadd.s32 %v730, %v754
    %v763 = vadd.s32 %v731, %v755
    %v764 = vadd.s32 %v732, %v756
    %v765 = vadd.s32 %v733, %v757
    %vm766 = vcmp.lt.s32.totalorder %v758, 7
    %v767 = vsel %vm766, %v758, 7
    %vm768 = vcmp.lt.s32.totalorder %v759, 7
    %v769 = vsel %vm768, %v759, 7
    %vm770 = vcmp.lt.s32.totalorder %v760, 7
    %v771 = vsel %vm770, %v760, 7
    %vm772 = vcmp.lt.s32.totalorder %v761, 7
    %v773 = vsel %vm772, %v761, 7
    %vm774 = vcmp.lt.s32.totalorder %v762, 7
    %v775 = vsel %vm774, %v762, 7
    %vm776 = vcmp.lt.s32.totalorder %v763, 7
    %v777 = vsel %vm776, %v763, 7
    %vm778 = vcmp.lt.s32.totalorder %v764, 7
    %v779 = vsel %vm778, %v764, 7
    %vm780 = vcmp.lt.s32.totalorder %v765, 7
    %v781 = vsel %vm780, %v765, 7
    %v782 = vrot.slane %v769, 7
    %v783 = vsel %vm480, %v782, %v767
    %v784 = vrot.slane %v771, 6
    %v785 = vsel %vm483, %v784, %v783
    %v786 = vrot.slane %v773, 5
    %v787 = vsel %vm486, %v786, %v785
    %v788 = vrot.slane %v775, 4
    %v789 = vsel %vm489, %v788, %v787
    %v790 = vrot.slane %v777, 3
    %v791 = vsel %vm492, %v790, %v789
    %v792 = vrot.slane %v779, 2
    %v793 = vsel %vm495, %v792, %v791
    %v794 = vrot.slane %v781, 1
    %v795 = vsel %vm498, %v794, %v793
    %796 = vst [vmem:[#allocation7] sm:$0xff] %v795
    // Predicated region
    $region18: #{tpu_custom_call.1} parent=1 // pred_check
      _
    $region19: #{tpu_custom_call.1} parent=1 // pred_check_branch
      %798 = sbr.rel (0) target = $region21
    $region20: #{tpu_custom_call.1} parent=1 // pred_region
      %s800 = ssub.s32 128, 128
      %801 = vsyncadd [#allocation4], %s800
      %s803 = sshll.u32 [#allocation7], 4
      %s804 = int_to_ptr.vmem [resolvable:$true] %s803
      %806 = dma.vmem_to_hbm [thread:$0]  %s804, 128, %s2, [#allocation4]
    $region21: #{tpu_custom_call.1} parent=1 // pred_fallthru
      _
    // Predicated region
    $region22: #{tpu_custom_call.1} parent=1 // pred_check
      _
    $region23: #{tpu_custom_call.1} parent=1 // pred_check_branch
      %808 = sbr.rel (0) target = $region25
    $region24: #{tpu_custom_call.1} parent=1 // pred_region
      %809 = dma.done [#allocation4], 128
    $region25: #{tpu_custom_call.1} parent=1 // pred_fallthru
      _
    %810 = vsyncpa [#allocation3], 1
    %811 = vsyncpa [#allocation6], 1
    %812 = vsyncpa [#allocation4], 1

</llo_original>
